<compile_context>
chip_gen: v5e
topology: v5e:2x2
jax: 0.10.0
libtpu: 0.0.40
codegen_flags: <defaults>
</compile_context>

<pallas_src>
import jax
import jax.numpy as jnp
import numpy as np
from jax.experimental import pallas as pl
from jax.experimental.pallas import tpu as pltpu


# ----------------------------- Pallas kernel ------------------------------ #
def _pos_enc_kernel(x_ref, enc_ref, out_ref):
    # x_ref: (B, S, D)   enc_ref: (S, D)   out = x + enc (broadcast over batch)
    out_ref[...] = x_ref[...] + enc_ref[...][None, :, :]


# ------------------------------- wrapper ----------------------------------- #
def positional_encoding(x, encoding):
    """x: (B, S, D); encoding: (max_len, D) with S <= max_len."""
    B, S, D = x.shape
    max_len, De = encoding.shape
    assert De == D and S <= max_len

    return pl.pallas_call(
        _pos_enc_kernel,
        out_shape=jax.ShapeDtypeStruct((B, S, D), x.dtype),
        grid=(1,),
        in_specs=[
            pl.BlockSpec((B, S, D), lambda i: (0, 0, 0)),
            # block (S, D) at block index (0, 0) == encoding[:S, :]
            pl.BlockSpec((S, D), lambda i: (0, 0)),
        ],
        out_specs=pl.BlockSpec((B, S, D), lambda i: (0, 0, 0)),
        compiler_params=pltpu.CompilerParams(
            dimension_semantics=("arbitrary",)),
    )(x, encoding)


# ------------------------- pure-JAX reference ------------------------------ #
def positional_encoding_ref(x, encoding):
    S = x.shape[1]
    return x + encoding[:S, :][None, :, :]


# --------------------------------- main ------------------------------------ #
if __name__ == "__main__":
    B, S, D, MAX_LEN = 2, 8, 128, 20   # [batch, len, dim], len <= max_len

    key = jax.random.PRNGKey(0)
    kx, ke = jax.random.split(key)
    x = jax.random.normal(kx, (B, S, D), jnp.float32)
    # nn.Parameter init: normal_(mean=0, std=0.02)
    encoding = (0.02 * jax.random.normal(ke, (MAX_LEN, D))).astype(jnp.float32)

    out = jax.block_until_ready(positional_encoding(x, encoding))
    ref = jax.block_until_ready(positional_encoding_ref(x, encoding))

    np.testing.assert_allclose(np.asarray(out), np.asarray(ref),
                               rtol=1e-6, atol=1e-6)
    assert out.shape == (B, S, D)
    print("KERNEL_OK")
</pallas_src>

<mosaic_0001>
module attributes {stable_mosaic.version = 11 : i64} {
  func.func @_pos_enc_kernel(%arg0: i32, %arg1: memref<2x8x128xf32, #tpu.memory_space<vmem>>, %arg2: memref<8x128xf32, #tpu.memory_space<vmem>>, %arg3: memref<2x8x128xf32, #tpu.memory_space<vmem>>) attributes {dimension_semantics = [#tpu.dimension_semantics<arbitrary>], iteration_bounds = array<i64: 1>, scalar_prefetch = 0 : i64, scratch_operands = 0 : i64, tpu.core_type = #tpu.core_type<tc>, window_params = [{pipeline_mode = #tpu.pipeline_mode<synchronous>, transform_indices = @transform_0, window_bounds = array<i64: 2, 8, 128>}, {transform_indices = @transform_1, window_bounds = array<i64: 8, 128>}, {pipeline_mode = #tpu.pipeline_mode<synchronous>, transform_indices = @transform_2, window_bounds = array<i64: 2, 8, 128>}]} {
    %c0 = arith.constant 0 : index
    %c0_0 = arith.constant 0 : index
    %c0_1 = arith.constant 0 : index
    %0 = vector.load %arg1[%c0, %c0_0, %c0_1] : memref<2x8x128xf32, #tpu.memory_space<vmem>>, vector<2x8x128xf32>
    %c0_2 = arith.constant 0 : index
    %c0_3 = arith.constant 0 : index
    %1 = vector.load %arg2[%c0_2, %c0_3] : memref<8x128xf32, #tpu.memory_space<vmem>>, vector<8x128xf32>
    %2 = vector.shape_cast %1 : vector<8x128xf32> to vector<1x8x128xf32>
    %3 = vector.broadcast %2 : vector<1x8x128xf32> to vector<2x8x128xf32>
    %4 = arith.addf %0, %3 : vector<2x8x128xf32>
    %c0_4 = arith.constant 0 : index
    %c0_5 = arith.constant 0 : index
    %c0_6 = arith.constant 0 : index
    %5 = vector.load %arg3[%c0_4, %c0_5, %c0_6] : memref<2x8x128xf32, #tpu.memory_space<vmem>>, vector<2x8x128xf32>
    tpu.vector_store %arg3[%c0_4, %c0_5, %c0_6], %4 {strides = array<i32>} : memref<2x8x128xf32, #tpu.memory_space<vmem>>, vector<2x8x128xf32>,
    return
  }
  func.func @transform_0(%arg0: i32) -> (i32, i32, i32) {
    %c0_i32 = arith.constant 0 : i32
    %c0_i32_0 = arith.constant 0 : i32
    %c0_i32_1 = arith.constant 0 : i32
    %c0_i32_2 = arith.constant 0 : i32
    return %c0_i32, %c0_i32_0, %c0_i32_1 : i32, i32, i32
  }
  func.func @transform_1(%arg0: i32) -> (i32, i32) {
    %c0_i32 = arith.constant 0 : i32
    %c0_i32_0 = arith.constant 0 : i32
    %c0_i32_1 = arith.constant 0 : i32
    return %c0_i32, %c0_i32_0 : i32, i32
  }
  func.func @transform_2(%arg0: i32) -> (i32, i32, i32) {
    %c0_i32 = arith.constant 0 : i32
    %c0_i32_0 = arith.constant 0 : i32
    %c0_i32_1 = arith.constant 0 : i32
    %c0_i32_2 = arith.constant 0 : i32
    return %c0_i32, %c0_i32_0, %c0_i32_1 : i32, i32, i32
  }
}

</mosaic_0001>

<llo_original>
// kernel: tpu_custom_call.1
$region0: #{tpu_custom_call.1}
  #allocation0 [shape = 'u32[]', space=smem, size = 0x4, offset = 0x4, fixed_abs, tag = 'smem constant byte address 0x4 - core index']
  #allocation1 [shape = 'u32[72,128]{1,0:T(1,128)}', space=vmem, size = 0x9000, scoped, tag = 'internal scratch']
  %s0 = inlined_call_operand.hbm [shape: f32[2,8,128], index: 0, kind: input, shape index: {}]
  %s1 = inlined_call_operand.hbm [shape: f32[20,128], index: 1, kind: input, shape index: {}]
  %s2 = inlined_call_operand.hbm [shape: f32[2,8,128], index: 2, kind: output, shape index: {}]
  %s3 = sld [smem:[#allocation0]]
  $region26: #{tpu_custom_call.1} parent=0
    _
  %s5 = ssub.s32 1, %s3
  %s6 = scalar_select 0, %s5, %s3
  $region1: #{tpu_custom_call.1} parent=0
    #allocation2 [shape = 'u8[8192]{0}', space=vmem, size = 0x2000, scoped, tag = 'input window, operand 0, single buffered']
    #allocation3 [shape = 's32[1]{0}', space=sflag, size = 0x4, scoped, tag = 'scoped memory for tpu_custom_call.1']
    #allocation4 [shape = 's32[1]{0}', space=sflag, size = 0x4, scoped, tag = 'scoped memory for tpu_custom_call.1']
    #allocation5 [shape = 'u8[4096]{0}', space=vmem, size = 0x1000, scoped, tag = 'input window, operand 1, single buffered']
    #allocation6 [shape = 's32[1]{0}', space=sflag, size = 0x4, scoped, tag = 'scoped memory for tpu_custom_call.1']
    #allocation7 [shape = 'u8[8192]{0}', space=vmem, size = 0x2000, scoped, tag = 'output window, operand 0, single buffered']
    %7 = vsyncpa [#allocation3], 0
    %8 = vsyncpa [#allocation6], 0
    %9 = vsyncpa [#allocation4], 0
    // Predicated region
    $region2: #{tpu_custom_call.1} parent=1 // pred_check
      _
    $region3: #{tpu_custom_call.1} parent=1 // pred_check_branch
      %11 = sbr.rel (0) target = $region5
    $region4: #{tpu_custom_call.1} parent=1 // pred_region
      %13 = vsyncadd [#allocation3], 0
      %s14 = sshll.u32 %s0, 4
      %s15 = int_to_ptr.hbm [resolvable:$true] %s14
      %s16 = sshll.u32 [#allocation2], 4
      %s17 = int_to_ptr.vmem [resolvable:$true] %s16
      %22 = dma.hbm_to_vmem [thread:$0]  %s15, 256, %s17, [#allocation3], 128, 128, 8
    $region5: #{tpu_custom_call.1} parent=1 // pred_fallthru
      _
    // Predicated region
    $region6: #{tpu_custom_call.1} parent=1 // pred_check
      _
    $region7: #{tpu_custom_call.1} parent=1 // pred_check_branch
      %24 = sbr.rel (0) target = $region9
    $region8: #{tpu_custom_call.1} parent=1 // pred_region
      %26 = vsyncadd [#allocation6], 0
      %s28 = sshll.u32 %s1, 4
      %s29 = int_to_ptr.hbm [resolvable:$true] %s28
      %s30 = sshll.u32 [#allocation5], 4
      %s31 = int_to_ptr.vmem [resolvable:$true] %s30
      %33 = dma.hbm_to_vmem [thread:$0]  %s29, 128, %s31, [#allocation6]
    $region9: #{tpu_custom_call.1} parent=1 // pred_fallthru
      _
    // Predicated region
    $region10: #{tpu_custom_call.1} parent=1 // pred_check
      _
    $region11: #{tpu_custom_call.1} parent=1 // pred_check_branch
      %35 = sbr.rel (0) target = $region13
    $region12: #{tpu_custom_call.1} parent=1 // pred_region
      %37 = dma.done [#allocation3], 256
    $region13: #{tpu_custom_call.1} parent=1 // pred_fallthru
      _
    // Predicated region
    $region14: #{tpu_custom_call.1} parent=1 // pred_check
      _
    $region15: #{tpu_custom_call.1} parent=1 // pred_check_branch
      %39 = sbr.rel (0) target = $region17
    $region16: #{tpu_custom_call.1} parent=1 // pred_region
      %41 = dma.done [#allocation6], 128
    $region17: #{tpu_custom_call.1} parent=1 // pred_fallthru
      _
    %v42 = vld [vmem:[#allocation2] sm:$0xff]
    %v43 = vld [vmem:[#allocation2 + $0x8] sm:$0xff]
    %v44 = vld [vmem:[#allocation5] sm:$0xff]
    %v45 = vadd.f32 %v42, %v44
    %v46 = vadd.f32 %v43, %v44
    %47 = vst [vmem:[#allocation7] sm:$0xff] %v45
    %48 = vst [vmem:[#allocation7 + $0x8] sm:$0xff] %v46
    // Predicated region
    $region18: #{tpu_custom_call.1} parent=1 // pred_check
      _
    $region19: #{tpu_custom_call.1} parent=1 // pred_check_branch
      %50 = sbr.rel (0) target = $region21
    $region20: #{tpu_custom_call.1} parent=1 // pred_region
      %52 = vsyncadd [#allocation4], 0
      %s53 = sshll.u32 [#allocation7], 4
      %s54 = int_to_ptr.vmem [resolvable:$true] %s53
      %s55 = sshll.u32 %s2, 4
      %s56 = int_to_ptr.hbm [resolvable:$true] %s55
      %61 = dma.vmem_to_hbm [thread:$0]  %s54, 256, %s56, [#allocation4], 128, 128, 8
    $region21: #{tpu_custom_call.1} parent=1 // pred_fallthru
      _
    // Predicated region
    $region22: #{tpu_custom_call.1} parent=1 // pred_check
      _
    $region23: #{tpu_custom_call.1} parent=1 // pred_check_branch
      %63 = sbr.rel (0) target = $region25
    $region24: #{tpu_custom_call.1} parent=1 // pred_region
      %65 = dma.done [#allocation4], 256
    $region25: #{tpu_custom_call.1} parent=1 // pred_fallthru
      _
    %66 = vsyncpa [#allocation3], 1
    %67 = vsyncpa [#allocation6], 1
    %68 = vsyncpa [#allocation4], 1

</llo_original>
